<compile_context>
chip_gen: v6e
topology: v6e:2x2x1
jax: 0.10.0
libtpu: 0.0.40
codegen_flags: <defaults>
</compile_context>

<pallas_src>
import jax
import jax.numpy as jnp
from jax import lax
from jax.experimental import pallas as pl
from jax.experimental.pallas import tpu as pltpu


# ----------------------------------------------------------------------------
# Plain-JAX glue: brute-force KNN (matmul form) and K-major gather.
# TODO(synk): KNN + index gather are data-dependent scatter/gather with no clean
# BlockSpec expression; kept in plain JAX (O(Nq*Nd) distance matrix; chunk/kernelize
# for production point counts).
# ----------------------------------------------------------------------------
def _knn_idx(query, db, k):
    # query [B, Nq, 3], db [B, Nd, 3] -> [B, Nq, k] indices of k nearest in db
    d2 = (jnp.sum(query * query, axis=-1, keepdims=True)
          - 2.0 * jnp.einsum("bqc,bdc->bqd", query, db)
          + jnp.sum(db * db, axis=-1)[:, None, :])
    _, idx = lax.top_k(-d2, k)
    return idx


def _group(points_cl, idx):
    # points_cl [B, N, C], idx [B, ...] -> [B, ..., C]
    return jax.vmap(lambda p, i: p[i])(points_cl, idx)


def _pick_tile(n1):
    for t in (512, 256, 128):
        if n1 % t == 0:
            return t
    return n1


# ----------------------------------------------------------------------------
# Fused kernel: shared MLP1 on one neighbour slab, running max over K (grid
# reduction axis), then concat(feature1) + MLP2 and lane-dense transposed store.
# ----------------------------------------------------------------------------
def _make_kernel(n_mlp1, n_mlp2, nsample, has_feat1):
    n_params = 2 * n_mlp1 + 2 + (1 if has_feat1 else 0) + 2 * (n_mlp2 - 1)

    def kernel(*refs):
        pos = 0
        feat_ref = refs[pos]; pos += 1
        if has_feat1:
            f1_ref = refs[pos]; pos += 1
        prm = refs[pos:pos + n_params]
        out_ref = refs[pos + n_params]
        acc_ref = refs[pos + n_params + 1]

        k = pl.program_id(2)

        def dot(x, w):  # (R, Ci) @ (Ci, Co) -> (R, Co) f32, bf16 operands on the MXU
            return jnp.dot(x.astype(jnp.bfloat16), w,
                           preferred_element_type=jnp.float32)

        def dot_t(w_t, x):  # (Co, Ci) x (R, Ci) -> (Co, R)  (transposed-RHS matmul)
            return lax.dot_general(
                w_t, x.astype(jnp.bfloat16),
                dimension_numbers=(((1,), (1,)), ((), ())),
                preferred_element_type=jnp.float32)

        # ---- shared MLP1 (folded Conv2d+BN2d+ReLU) on this neighbour's slab ----
        h = feat_ref[0, 0]                               # (TILE_N1, Cin) bf16
        for i in range(n_mlp1):
            h = jnp.maximum(dot(h, prm[2 * i][...]) + prm[2 * i + 1][...], 0.0)
        h = h.astype(jnp.float32)                        # (TILE_N1, c_mid)

        # ---- running max over the K neighbours (grid reduction axis) ----
        @pl.when(k == 0)
        def _():
            acc_ref[...] = jnp.full(acc_ref.shape, -jnp.inf, acc_ref.dtype)

        acc_ref[...] = jnp.maximum(acc_ref[...], h)

        # ---- last neighbour: concat(feature1) via split weights + MLP2 ----
        @pl.when(k == nsample - 1)
        def _():
            p = 2 * n_mlp1
            m = acc_ref[...]                             # (TILE_N1, c_mid) f32
            w0a = prm[p][...]; p += 1
            if has_feat1:
                w0b = prm[p][...]; p += 1
            b0 = prm[p][...]; p += 1

            if n_mlp2 == 1:
                # single MLP2 layer: produce (Cout, TILE_N1) directly (lane-dense)
                o = dot_t(w0a, m)
                if has_feat1:
                    o = o + dot_t(w0b, f1_ref[0])
                o = jnp.maximum(o + b0, 0.0)             # b0: (Cout, 1)
            else:
                h2 = dot(m, w0a)
                if has_feat1:
                    h2 = h2 + dot(f1_ref[0], w0b)
                h2 = jnp.maximum(h2 + b0, 0.0)           # b0: (1, C0)
                for _j in range(n_mlp2 - 2):
                    h2 = jnp.maximum(dot(h2, prm[p][...]) + prm[p + 1][...], 0.0)
                    p += 2
                # last layer written transposed -> lane-dense (Cout, TILE_N1)
                o = jnp.maximum(dot_t(prm[p][...], h2) + prm[p + 1][...], 0.0)

            out_ref[0] = o.astype(out_ref.dtype)

    return kernel


# ----------------------------------------------------------------------------
# Shared preprocessing: KNN, K-major gather, concat, and eval-mode BN folding.
# ----------------------------------------------------------------------------
def _prepare(params, pos1, pos2, feature1, feature2, nsample):
    B, _, N1 = pos1.shape
    C2 = feature2.shape[1]
    has_feat1 = feature1 is not None

    pos1_t = jnp.transpose(pos1, (0, 2, 1))              # [B, N1, 3]
    pos2_t = jnp.transpose(pos2, (0, 2, 1))              # [B, N2, 3]
    feat2_t = jnp.transpose(feature2, (0, 2, 1))          # [B, N2, C2]

    idx = _knn_idx(pos1_t, pos2_t, nsample)               # [B, N1, K]
    idx_km = jnp.transpose(idx, (0, 2, 1))                # [B, K, N1] (tiny)

    pos2_g = _group(pos2_t, idx_km)                       # [B, K, N1, 3]
    feat2_g = _group(feat2_t, idx_km)                     # [B, K, N1, C2]
    pos_diff = pos2_g - pos1_t[:, None, :, :]
    # torch.cat([feat2_grouped, pos_diff], dim=1) -> channels-last concat order
    feat = jnp.concatenate([feat2_g, pos_diff], axis=-1).astype(jnp.bfloat16)

    feat1_cl = (jnp.transpose(feature1, (0, 2, 1)).astype(jnp.bfloat16)
                if has_feat1 else None)                   # [B, N1, C1]

    mlp1, mlp2 = params["mlp1"], params["mlp2"]
    n_mlp1, n_mlp2 = len(mlp1), len(mlp2)
    cin = C2 + 3
    c_mid = mlp1[-1]["w"].shape[1] if n_mlp1 else cin
    # TODO(synk): mlp2 == [] path (output = concat of max-pooled feature and feature1)
    # is not kernelized; the module is normally configured with a non-empty mlp2.
    assert n_mlp2 >= 1, "mlp2 must be non-empty for the Pallas kernel"
    cout = mlp2[-1]["w"].shape[1]

    eps = 1e-5

    def fold(layer):
        # TODO(synk): BatchNorm folded in eval mode (running stats), not batch stats.
        scale = layer["gamma"] / jnp.sqrt(layer["var"] + eps)
        w = (layer["w"] * scale[None, :]).astype(jnp.bfloat16)
        b = (layer["beta"] - layer["mean"] * scale).astype(jnp.float32)
        return w, b

    flat = []
    for layer in mlp1:
        w, b = fold(layer)
        flat += [w, b.reshape(1, -1)]

    # First MLP2 layer: split its input channels into [max-pooled (c_mid) | feature1 (C1)]
    w0, b0 = fold(mlp2[0])
    w0a, w0b = w0[:c_mid], w0[c_mid:]
    if n_mlp2 == 1:
        flat += [w0a.T]                                   # (Cout, c_mid)
        if has_feat1:
            flat += [w0b.T]                               # (Cout, C1)
        flat += [b0.reshape(-1, 1)]                       # (Cout, 1)
    else:
        flat += [w0a]
        if has_feat1:
            flat += [w0b]
        flat += [b0.reshape(1, -1)]
        for layer in mlp2[1:-1]:
            w, b = fold(layer)
            flat += [w, b.reshape(1, -1)]
        wl, bl = fold(mlp2[-1])
        flat += [wl.T, bl.reshape(-1, 1)]                 # transposed last layer

    return dict(feat=feat, feat1=feat1_cl, flat=flat, n_mlp1=n_mlp1,
                n_mlp2=n_mlp2, cin=cin, c_mid=c_mid, cout=cout,
                has_feat1=has_feat1, B=B, N1=N1)


# ----------------------------------------------------------------------------
# Wrapper: pallas_call with (B, N1_tiles, K) grid.
# ----------------------------------------------------------------------------
def pointnet_setupconv(params, pos1, pos2, feature1, feature2, nsample, tile_n1=None):
    prep = _prepare(params, pos1, pos2, feature1, feature2, nsample)
    B, N1 = prep["B"], prep["N1"]
    cin, c_mid, cout = prep["cin"], prep["c_mid"], prep["cout"]
    has_feat1 = prep["has_feat1"]
    flat = prep["flat"]

    tile = _pick_tile(N1) if tile_n1 is None else tile_n1
    assert N1 % tile == 0

    def _pspec(a):
        nd = a.ndim
        return pl.BlockSpec(a.shape, lambda b, n, k, _nd=nd: (0,) * _nd)

    in_specs = [pl.BlockSpec((1, 1, tile, cin), lambda b, n, k: (b, k, n, 0))]
    inputs = [prep["feat"]]
    if has_feat1:
        c1 = prep["feat1"].shape[-1]
        in_specs.append(pl.BlockSpec((1, tile, c1), lambda b, n, k: (b, n, 0)))
        inputs.append(prep["feat1"])
    in_specs += [_pspec(a) for a in flat]
    inputs += flat

    kernel = _make_kernel(prep["n_mlp1"], prep["n_mlp2"], nsample, has_feat1)

    out = pl.pallas_call(
        kernel,
        out_shape=jax.ShapeDtypeStruct((B, cout, N1), jnp.float32),
        grid_spec=pltpu.PrefetchScalarGridSpec(
            num_scalar_prefetch=0,
            grid=(B, N1 // tile, nsample),
            in_specs=in_specs,
            out_specs=pl.BlockSpec((1, cout, tile), lambda b, n, k: (b, 0, n)),
            scratch_shapes=[pltpu.VMEM((tile, c_mid), jnp.float32)]),
        compiler_params=pltpu.CompilerParams(
            dimension_semantics=("parallel", "parallel", "arbitrary"),
            vmem_limit_bytes=48 * 1024 * 1024),
    )(*inputs)
    return out                                            # [B, Cout, N1]


# ----------------------------------------------------------------------------
# Pure-JAX reference mirroring the kernel math (same folded BN + bf16 casts).
# ----------------------------------------------------------------------------
def pointnet_setupconv_ref(params, pos1, pos2, feature1, feature2, nsample):
    prep = _prepare(params, pos1, pos2, feature1, feature2, nsample)
    flat = prep["flat"]
    n_mlp1, n_mlp2 = prep["n_mlp1"], prep["n_mlp2"]
    has_feat1 = prep["has_feat1"]

    def dot(x, w):
        return jnp.dot(x.astype(jnp.bfloat16), w, preferred_element_type=jnp.float32)

    h = prep["feat"]                                      # [B, K, N1, Cin] bf16
    for i in range(n_mlp1):
        h = jnp.maximum(dot(h, flat[2 * i]) + flat[2 * i + 1], 0.0)
    m = jnp.max(h.astype(jnp.float32), axis=1)            # [B, N1, c_mid]

    p = 2 * n_mlp1
    if n_mlp2 == 1:
        w0a = flat[p]; p += 1
        o = jnp.einsum("bnc,oc->bon", m.astype(jnp.bfloat16), w0a,
                       preferred_element_type=jnp.float32)
        if has_feat1:
            w0b = flat[p]; p += 1
            o = o + jnp.einsum("bnc,oc->bon", prep["feat1"], w0b,
                               preferred_element_type=jnp.float32)
        o = jnp.maximum(o + flat[p][None], 0.0)
    else:
        w0a = flat[p]; p += 1
        h2 = dot(m, w0a)
        if has_feat1:
            w0b = flat[p]; p += 1
            h2 = h2 + dot(prep["feat1"], w0b)
        h2 = jnp.maximum(h2 + flat[p], 0.0); p += 1
        for _j in range(n_mlp2 - 2):
            h2 = jnp.maximum(dot(h2, flat[p]) + flat[p + 1], 0.0)
            p += 2
        wl, bl = flat[p], flat[p + 1]
        o = jnp.einsum("bnc,oc->bon", h2.astype(jnp.bfloat16), wl,
                       preferred_element_type=jnp.float32)
        o = jnp.maximum(o + bl[None], 0.0)
    return o                                              # [B, Cout, N1]


# ----------------------------------------------------------------------------
# Deterministic parameter init (Conv bias=False + BatchNorm affine, per __init__).
# ----------------------------------------------------------------------------
def init_params(key, f1_channel, f2_channel, mlp, mlp2):
    n_layers = max(1, len(mlp) + len(mlp2))
    keys = iter(jax.random.split(key, 5 * n_layers))

    def conv_bn(cin, cout):
        return dict(
            w=0.2 * jax.random.normal(next(keys), (cin, cout), jnp.float32),
            gamma=1.0 + 0.1 * jax.random.normal(next(keys), (cout,), jnp.float32),
            beta=0.1 * jax.random.normal(next(keys), (cout,), jnp.float32),
            mean=0.1 * jax.random.normal(next(keys), (cout,), jnp.float32),
            var=1.0 + 0.1 * jnp.abs(jax.random.normal(next(keys), (cout,), jnp.float32)),
        )

    params = {"mlp1": [], "mlp2": []}
    last = f2_channel + 3
    for out in mlp:
        params["mlp1"].append(conv_bn(last, out))
        last = out
    last = (mlp[-1] if len(mlp) else f2_channel + 3) + f1_channel
    for out in mlp2:
        params["mlp2"].append(conv_bn(last, out))
        last = out
    return params


if __name__ == "__main__":
    key = jax.random.PRNGKey(0)
    ks = jax.random.split(key, 8)

    B, N1, N2 = 2, 16, 8
    f1c, f2c = 4, 6
    nsample = 4

    pos1 = jax.random.normal(ks[0], (B, 3, N1), jnp.float32)
    pos2 = jax.random.normal(ks[1], (B, 3, N2), jnp.float32)
    feat1 = jax.random.normal(ks[2], (B, f1c, N1), jnp.float32)
    feat2 = jax.random.normal(ks[3], (B, f2c, N2), jnp.float32)

    # Config A: skip-features present, single mlp2 layer (transposed single-layer path).
    mlp_a, mlp2_a = [16, 32], [32]
    params_a = init_params(ks[4], f1c, f2c, mlp_a, mlp2_a)
    out_a = jax.block_until_ready(
        pointnet_setupconv(params_a, pos1, pos2, feat1, feat2, nsample))
    ref_a = pointnet_setupconv_ref(params_a, pos1, pos2, feat1, feat2, nsample)
    assert out_a.shape == (B, mlp2_a[-1], N1), out_a.shape
    assert bool(jnp.all(jnp.isfinite(out_a)))
    assert bool(jnp.allclose(out_a, ref_a, atol=2e-2, rtol=2e-2)), \
        float(jnp.max(jnp.abs(out_a - ref_a)))

    # Config B: feature1=None, multi-layer mlp2.
    mlp_b, mlp2_b = [16], [64, 32]
    params_b = init_params(ks[5], 0, f2c, mlp_b, mlp2_b)
    out_b = jax.block_until_ready(
        pointnet_setupconv(params_b, pos1, pos2, None, feat2, nsample))
    ref_b = pointnet_setupconv_ref(params_b, pos1, pos2, None, feat2, nsample)
    assert out_b.shape == (B, mlp2_b[-1], N1), out_b.shape
    assert bool(jnp.all(jnp.isfinite(out_b)))
    assert bool(jnp.allclose(out_b, ref_b, atol=2e-2, rtol=2e-2)), \
        float(jnp.max(jnp.abs(out_b - ref_b)))

    print("KERNEL_OK")
</pallas_src>

<mosaic_0001>
module attributes {stable_mosaic.version = 11 : i64} {
  func.func @kernel(%arg0: i32, %arg1: i32, %arg2: i32, %arg3: memref<1x1x16x9xbf16, #tpu.memory_space<vmem>>, %arg4: memref<1x16x4xbf16, #tpu.memory_space<vmem>>, %arg5: memref<9x16xbf16, #tpu.memory_space<vmem>>, %arg6: memref<1x16xf32, #tpu.memory_space<vmem>>, %arg7: memref<16x32xbf16, #tpu.memory_space<vmem>>, %arg8: memref<1x32xf32, #tpu.memory_space<vmem>>, %arg9: memref<32x32xbf16, #tpu.memory_space<vmem>>, %arg10: memref<32x4xbf16, #tpu.memory_space<vmem>>, %arg11: memref<32x1xf32, #tpu.memory_space<vmem>>, %arg12: memref<1x32x16xf32, #tpu.memory_space<vmem>>, %arg13: memref<16x32xf32, #tpu.memory_space<vmem>>) attributes {dimension_semantics = [#tpu.dimension_semantics<parallel>, #tpu.dimension_semantics<parallel>, #tpu.dimension_semantics<arbitrary>], iteration_bounds = array<i64: 2, 1, 4>, scalar_prefetch = 0 : i64, scratch_operands = 1 : i64, tpu.core_type = #tpu.core_type<tc>, window_params = [{transform_indices = @transform_0, window_bounds = array<i64: 1, 1, 16, 9>}, {transform_indices = @transform_1, window_bounds = array<i64: 1, 16, 4>}, {pipeline_mode = #tpu.pipeline_mode<synchronous>, transform_indices = @transform_2, window_bounds = array<i64: 9, 16>}, {pipeline_mode = #tpu.pipeline_mode<synchronous>, transform_indices = @transform_3, window_bounds = array<i64: 1, 16>}, {pipeline_mode = #tpu.pipeline_mode<synchronous>, transform_indices = @transform_4, window_bounds = array<i64: 16, 32>}, {pipeline_mode = #tpu.pipeline_mode<synchronous>, transform_indices = @transform_5, window_bounds = array<i64: 1, 32>}, {pipeline_mode = #tpu.pipeline_mode<synchronous>, transform_indices = @transform_6, window_bounds = array<i64: 32, 32>}, {pipeline_mode = #tpu.pipeline_mode<synchronous>, transform_indices = @transform_7, window_bounds = array<i64: 32, 4>}, {pipeline_mode = #tpu.pipeline_mode<synchronous>, transform_indices = @transform_8, window_bounds = array<i64: 32, 1>}, {transform_indices = @transform_9, window_bounds = array<i64: 1, 32, 16>}]} {
    %c0 = arith.constant 0 : index
    %c0_0 = arith.constant 0 : index
    %c0_1 = arith.constant 0 : index
    %c0_2 = arith.constant 0 : index
    %0 = vector.load %arg3[%c0, %c0_0, %c0_1, %c0_2] : memref<1x1x16x9xbf16, #tpu.memory_space<vmem>>, vector<1x1x16x9xbf16>
    %1 = vector.shape_cast %0 : vector<1x1x16x9xbf16> to vector<16x9xbf16>
    %c0_3 = arith.constant 0 : index
    %c0_4 = arith.constant 0 : index
    %2 = vector.load %arg5[%c0_3, %c0_4] : memref<9x16xbf16, #tpu.memory_space<vmem>>, vector<9x16xbf16>
    %cst = arith.constant dense<0.000000e+00> : vector<16x16xf32>
    %3 = tpu.matmul %1, %2, %cst {dimension_numbers = #tpu.dot_dimension_numbers<[1], [0], [0], [1], [0, 0, 1, 1], [], []>} : vector<16x9xbf16>, vector<9x16xbf16>, vector<16x16xf32> -> vector<16x16xf32>
    %c0_5 = arith.constant 0 : index
    %c0_6 = arith.constant 0 : index
    %4 = vector.load %arg6[%c0_5, %c0_6] : memref<1x16xf32, #tpu.memory_space<vmem>>, vector<1x16xf32>
    %5 = vector.broadcast %4 : vector<1x16xf32> to vector<16x16xf32>
    %6 = arith.addf %3, %5 : vector<16x16xf32>
    %cst_7 = arith.constant 0.000000e+00 : f32
    %7 = vector.broadcast %cst_7 : f32 to vector<16x16xf32>
    %8 = arith.maximumf %6, %7 : vector<16x16xf32>
    %c0_8 = arith.constant 0 : index
    %c0_9 = arith.constant 0 : index
    %9 = vector.load %arg7[%c0_8, %c0_9] : memref<16x32xbf16, #tpu.memory_space<vmem>>, vector<16x32xbf16>
    %10 = arith.truncf %8 : vector<16x16xf32> to vector<16x16xbf16>
    %cst_10 = arith.constant dense<0.000000e+00> : vector<16x32xf32>
    %11 = tpu.matmul %10, %9, %cst_10 {dimension_numbers = #tpu.dot_dimension_numbers<[1], [0], [0], [1], [0, 0, 1, 1], [], []>} : vector<16x16xbf16>, vector<16x32xbf16>, vector<16x32xf32> -> vector<16x32xf32>
    %c0_11 = arith.constant 0 : index
    %c0_12 = arith.constant 0 : index
    %12 = vector.load %arg8[%c0_11, %c0_12] : memref<1x32xf32, #tpu.memory_space<vmem>>, vector<1x32xf32>
    %13 = vector.broadcast %12 : vector<1x32xf32> to vector<16x32xf32>
    %14 = arith.addf %11, %13 : vector<16x32xf32>
    %cst_13 = arith.constant 0.000000e+00 : f32
    %15 = vector.broadcast %cst_13 : f32 to vector<16x32xf32>
    %16 = arith.maximumf %14, %15 : vector<16x32xf32>
    %c0_i32 = arith.constant 0 : i32
    %17 = arith.cmpi eq, %arg2, %c0_i32 : i32
    %18 = arith.extui %17 : i1 to i32
    %c0_i32_14 = arith.constant 0 : i32
    %19 = arith.cmpi ne, %18, %c0_i32_14 : i32
    scf.if %19 {
      %cst_20 = arith.constant 0xFF800000 : f32
      %26 = vector.broadcast %cst_20 : f32 to vector<16x32xf32>
      %c0_21 = arith.constant 0 : index
      %c0_22 = arith.constant 0 : index
      %27 = vector.load %arg13[%c0_21, %c0_22] : memref<16x32xf32, #tpu.memory_space<vmem>>, vector<16x32xf32>
      tpu.vector_store %arg13[%c0_21, %c0_22], %26 {strides = array<i32>} : memref<16x32xf32, #tpu.memory_space<vmem>>, vector<16x32xf32>,
    } else {
    }
    %c0_15 = arith.constant 0 : index
    %c0_16 = arith.constant 0 : index
    %20 = vector.load %arg13[%c0_15, %c0_16] : memref<16x32xf32, #tpu.memory_space<vmem>>, vector<16x32xf32>
    %21 = arith.maximumf %20, %16 : vector<16x32xf32>
    %c0_17 = arith.constant 0 : index
    %c0_18 = arith.constant 0 : index
    %22 = vector.load %arg13[%c0_17, %c0_18] : memref<16x32xf32, #tpu.memory_space<vmem>>, vector<16x32xf32>
    tpu.vector_store %arg13[%c0_17, %c0_18], %21 {strides = array<i32>} : memref<16x32xf32, #tpu.memory_space<vmem>>, vector<16x32xf32>,
    %c3_i32 = arith.constant 3 : i32
    %23 = arith.cmpi eq, %arg2, %c3_i32 : i32
    %24 = arith.extui %23 : i1 to i32
    %c0_i32_19 = arith.constant 0 : i32
    %25 = arith.cmpi ne, %24, %c0_i32_19 : i32
    scf.if %25 {
      %c0_20 = arith.constant 0 : index
      %c0_21 = arith.constant 0 : index
      %26 = vector.load %arg13[%c0_20, %c0_21] : memref<16x32xf32, #tpu.memory_space<vmem>>, vector<16x32xf32>
      %c0_22 = arith.constant 0 : index
      %c0_23 = arith.constant 0 : index
      %27 = vector.load %arg9[%c0_22, %c0_23] : memref<32x32xbf16, #tpu.memory_space<vmem>>, vector<32x32xbf16>
      %c0_24 = arith.constant 0 : index
      %c0_25 = arith.constant 0 : index
      %28 = vector.load %arg10[%c0_24, %c0_25] : memref<32x4xbf16, #tpu.memory_space<vmem>>, vector<32x4xbf16>
      %c0_26 = arith.constant 0 : index
      %c0_27 = arith.constant 0 : index
      %29 = vector.load %arg11[%c0_26, %c0_27] : memref<32x1xf32, #tpu.memory_space<vmem>>, vector<32x1xf32>
      %30 = arith.truncf %26 : vector<16x32xf32> to vector<16x32xbf16>
      %cst_28 = arith.constant dense<0.000000e+00> : vector<32x16xf32>
      %31 = tpu.matmul %27, %30, %cst_28 {dimension_numbers = #tpu.dot_dimension_numbers<[1], [1], [0], [0], [0, 0, 1, 0], [], []>} : vector<32x32xbf16>, vector<16x32xbf16>, vector<32x16xf32> -> vector<32x16xf32>
      %c0_29 = arith.constant 0 : index
      %c0_30 = arith.constant 0 : index
      %c0_31 = arith.constant 0 : index
      %32 = vector.load %arg4[%c0_29, %c0_30, %c0_31] : memref<1x16x4xbf16, #tpu.memory_space<vmem>>, vector<1x16x4xbf16>
      %33 = vector.shape_cast %32 : vector<1x16x4xbf16> to vector<16x4xbf16>
      %cst_32 = arith.constant dense<0.000000e+00> : vector<32x16xf32>
      %34 = tpu.matmul %28, %33, %cst_32 {dimension_numbers = #tpu.dot_dimension_numbers<[1], [1], [0], [0], [0, 0, 1, 0], [], []>} : vector<32x4xbf16>, vector<16x4xbf16>, vector<32x16xf32> -> vector<32x16xf32>
      %35 = arith.addf %31, %34 : vector<32x16xf32>
      %36 = vector.broadcast %29 : vector<32x1xf32> to vector<32x16xf32>
      %37 = arith.addf %35, %36 : vector<32x16xf32>
      %cst_33 = arith.constant 0.000000e+00 : f32
      %38 = vector.broadcast %cst_33 : f32 to vector<32x16xf32>
      %39 = arith.maximumf %37, %38 : vector<32x16xf32>
      %c0_34 = arith.constant 0 : index
      %c0_35 = arith.constant 0 : index
      %c0_36 = arith.constant 0 : index
      %40 = vector.load %arg12[%c0_34, %c0_35, %c0_36] : memref<1x32x16xf32, #tpu.memory_space<vmem>>, vector<1x32x16xf32>
      %41 = vector.shape_cast %40 : vector<1x32x16xf32> to vector<32x16xf32>
      %42 = vector.shape_cast %39 : vector<32x16xf32> to vector<1x32x16xf32>
      tpu.vector_store %arg12[%c0_34, %c0_35, %c0_36], %42 {strides = array<i32>} : memref<1x32x16xf32, #tpu.memory_space<vmem>>, vector<1x32x16xf32>,
    } else {
    }
    return
  }
  func.func @transform_0(%arg0: i32, %arg1: i32, %arg2: i32) -> (i32, i32, i32, i32) {
    %c0_i32 = arith.constant 0 : i32
    %c0_i32_0 = arith.constant 0 : i32
    return %arg0, %arg2, %arg1, %c0_i32 : i32, i32, i32, i32
  }
  func.func @transform_1(%arg0: i32, %arg1: i32, %arg2: i32) -> (i32, i32, i32) {
    %c0_i32 = arith.constant 0 : i32
    %c0_i32_0 = arith.constant 0 : i32
    return %arg0, %arg1, %c0_i32 : i32, i32, i32
  }
  func.func @transform_2(%arg0: i32, %arg1: i32, %arg2: i32) -> (i32, i32) {
    %c0_i32 = arith.constant 0 : i32
    %c0_i32_0 = arith.constant 0 : i32
    %c0_i32_1 = arith.constant 0 : i32
    return %c0_i32, %c0_i32_0 : i32, i32
  }
  func.func @transform_3(%arg0: i32, %arg1: i32, %arg2: i32) -> (i32, i32) {
    %c0_i32 = arith.constant 0 : i32
    %c0_i32_0 = arith.constant 0 : i32
    %c0_i32_1 = arith.constant 0 : i32
    return %c0_i32, %c0_i32_0 : i32, i32
  }
  func.func @transform_4(%arg0: i32, %arg1: i32, %arg2: i32) -> (i32, i32) {
    %c0_i32 = arith.constant 0 : i32
    %c0_i32_0 = arith.constant 0 : i32
    %c0_i32_1 = arith.constant 0 : i32
    return %c0_i32, %c0_i32_0 : i32, i32
  }
  func.func @transform_5(%arg0: i32, %arg1: i32, %arg2: i32) -> (i32, i32) {
    %c0_i32 = arith.constant 0 : i32
    %c0_i32_0 = arith.constant 0 : i32
    %c0_i32_1 = arith.constant 0 : i32
    return %c0_i32, %c0_i32_0 : i32, i32
  }
  func.func @transform_6(%arg0: i32, %arg1: i32, %arg2: i32) -> (i32, i32) {
    %c0_i32 = arith.constant 0 : i32
    %c0_i32_0 = arith.constant 0 : i32
    %c0_i32_1 = arith.constant 0 : i32
    return %c0_i32, %c0_i32_0 : i32, i32
  }
  func.func @transform_7(%arg0: i32, %arg1: i32, %arg2: i32) -> (i32, i32) {
    %c0_i32 = arith.constant 0 : i32
    %c0_i32_0 = arith.constant 0 : i32
    %c0_i32_1 = arith.constant 0 : i32
    return %c0_i32, %c0_i32_0 : i32, i32
  }
  func.func @transform_8(%arg0: i32, %arg1: i32, %arg2: i32) -> (i32, i32) {
    %c0_i32 = arith.constant 0 : i32
    %c0_i32_0 = arith.constant 0 : i32
    %c0_i32_1 = arith.constant 0 : i32
    return %c0_i32, %c0_i32_0 : i32, i32
  }
  func.func @transform_9(%arg0: i32, %arg1: i32, %arg2: i32) -> (i32, i32, i32) {
    %c0_i32 = arith.constant 0 : i32
    %c0_i32_0 = arith.constant 0 : i32
    return %arg0, %c0_i32, %arg1 : i32, i32, i32
  }
}

</mosaic_0001>

<llo_original>
// kernel: tpu_custom_call.1
$region0: #{tpu_custom_call.1}
  #allocation0 [shape = 'u32[]', space=smem, size = 0x4, offset = 0x4, fixed_abs, tag = 'smem constant byte address 0x4 - core index']
  #allocation1 [shape = 'u32[144,128]{1,0:T(1,128)}', space=vmem, size = 0x12000, scoped, tag = 'internal scratch']
  #allocation2 [shape = 'f32[16,32]{1,0:T(8,128)}', space=vmem, size = 0x2000, scoped, tag = 'scratch operand']
  %s0 = inlined_call_operand.vmem [shape: bf16[2,4,16,9], index: 0, kind: input, shape index: {}]
  %s1 = inlined_call_operand.vmem [shape: bf16[2,16,4], index: 1, kind: input, shape index: {}]
  %s2 = inlined_call_operand.vmem [shape: bf16[9,16], index: 2, kind: input, shape index: {}]
  %s3 = inlined_call_operand.vmem [shape: f32[1,16], index: 3, kind: input, shape index: {}]
  %s4 = inlined_call_operand.vmem [shape: bf16[16,32], index: 4, kind: input, shape index: {}]
  %s5 = inlined_call_operand.vmem [shape: f32[1,32], index: 5, kind: input, shape index: {}]
  %s6 = inlined_call_operand.vmem [shape: bf16[32,32], index: 6, kind: input, shape index: {}]
  %s7 = inlined_call_operand.vmem [shape: bf16[32,4], index: 7, kind: input, shape index: {}]
  %s8 = inlined_call_operand.vmem [shape: f32[32,1], index: 8, kind: input, shape index: {}]
  %s9 = inlined_call_operand.vmem [shape: f32[2,32,16], index: 9, kind: output, shape index: {}]
  %s10 = sld [smem:[#allocation0]]
  $region77: #{tpu_custom_call.1} parent=0
    _
  %s12 = ssub.s32 1, %s10
  %s13 = scalar_select 0, %s12, %s10
  loop: start=0, step=1, limit=10
  $region2: #{tpu_custom_call.1} parent=0 // loop_pre_header
    _
  $region3: #{tpu_custom_call.1} parent=0 // loop_header
    %s15 = sphi 0, %s19
    %p16 = scmp.ge.s32.totalorder %s15, 10
    %s22 = sphi 0, %s41
    %s23 = sphi 0, %s37
    %s24 = sphi 0, %s33
    %s25 = sphi 0, %s22
    %s26 = sphi 0, %s23
    %s27 = sphi 0, %s24
    %s28 = sphi 0, %s25
    %s29 = sphi 0, %s26
    %s30 = sphi 0, %s27
    %s48 = sphi 0, %s50
    %s51 = sphi 0, %s48
    %s52 = sphi 0, %s51
    %s68 = sphi 0, %s52
    %s76 = sphi 0, %s78
    %s79 = sphi 0, %s76
    %s80 = sphi 0, %s79
    %s96 = sphi 0, %s80
    %s100 = sphi 0, %s100
    %s102 = sphi 0, %s100
    %s103 = sphi 0, %s102
    %s117 = sphi 0, %s103
    %s121 = sphi 0, %s121
    %s123 = sphi 0, %s121
    %s124 = sphi 0, %s123
    %s138 = sphi 0, %s124
    %s142 = sphi 0, %s142
    %s144 = sphi 0, %s142
    %s145 = sphi 0, %s144
    %s159 = sphi 0, %s145
    %s163 = sphi 0, %s163
    %s165 = sphi 0, %s163
    %s166 = sphi 0, %s165
    %s180 = sphi 0, %s166
    %s184 = sphi 0, %s184
    %s186 = sphi 0, %s184
    %s187 = sphi 0, %s186
    %s201 = sphi 0, %s187
    %s205 = sphi 0, %s205
    %s207 = sphi 0, %s205
    %s208 = sphi 0, %s207
    %s222 = sphi 0, %s208
    %s226 = sphi 0, %s226
    %s228 = sphi 0, %s226
    %s229 = sphi 0, %s228
    %s243 = sphi 0, %s229
    %s251 = sphi 0, %s253
    %s254 = sphi 0, %s251
    %s255 = sphi 0, %s254
    %s271 = sphi 0, %s255
  $region4: #{tpu_custom_call.1} parent=0 // loop_header_branch
    %18 = sbr.rel (%p16) target = $region8
  $region5: #{tpu_custom_call.1} parent=0 // loop_body
    %s20 = ssub.s32 %s15, 1
    %s21 = ssub.s32 %s15, 2
    %s31 = sadd.s32 1, %s24
    %p32 = scmp.ge.s32.totalorder %s31, 4
    %s33 = scalar_select %p32, 0, %s31
    %s34 = sadd.s32 1, %s23
    %s35 = scalar_select %p32, %s34, %s23
    %p36 = scmp.ge.s32.totalorder %s35, 1
    %s37 = scalar_select %p36, 0, %s35
    %s38 = sadd.s32 1, %s22
    %s39 = scalar_select %p36, %s38, %s22
    %p40 = scmp.ge.s32.totalorder %s39, 2
    %s41 = scalar_select %p40, 0, %s39
    %s42 = ssub.s32 %s22, %s41
    %s43 = ssub.s32 %s24, %s33
    %s44 = sor.u32 %s42, %s43
    %s45 = ssub.s32 %s23, %s37
    %s46 = sor.u32 %s44, %s45
    %p47 = scmp.eq.s32.totalorder %s46, 0
    %s49 = sadd.s32 %s48, 1
    %s50 = scalar_select %p47, %s48, %s49
    %p53 = pneg %p47
    %p54 = scmp.eq.s32.totalorder %s15, 7
    %p55 = por %p53, %p54
    %p56 = scmp.ne.s32.totalorder %s48, %s51
    %p57 = scmp.eq.s32.totalorder %s15, 0
    %p58 = por %p56, %p57
    %p59 = scmp.ne.s32.totalorder %s48, %s51
    %p60 = scmp.eq.s32.totalorder %s20, 7
    %p61 = por %p59, %p60
    %p62 = scmp.ne.s32.totalorder %s51, %s52
    %p63 = scmp.eq.s32.totalorder %s20, 0
    %p64 = por %p62, %p63
    %p65 = scmp.ne.s32.totalorder %s51, %s52
    %p66 = scmp.eq.s32.totalorder %s21, 7
    %p67 = por %p65, %p66
    %p69 = scmp.ne.s32.totalorder %s52, %s68
    %p70 = scmp.eq.s32.totalorder %s21, 0
    %p71 = por %p69, %p70
    %s72 = ssub.s32 %s22, %s41
    %s73 = ssub.s32 %s23, %s37
    %s74 = sor.u32 %s72, %s73
    %p75 = scmp.eq.s32.totalorder %s74, 0
    %s77 = sadd.s32 %s76, 1
    %s78 = scalar_select %p75, %s76, %s77
    %p81 = pneg %p75
    %p82 = scmp.eq.s32.totalorder %s15, 7
    %p83 = por %p81, %p82
    %p84 = scmp.ne.s32.totalorder %s76, %s79
    %p85 = scmp.eq.s32.totalorder %s15, 0
    %p86 = por %p84, %p85
    %p87 = scmp.ne.s32.totalorder %s76, %s79
    %p88 = scmp.eq.s32.totalorder %s20, 7
    %p89 = por %p87, %p88
    %p90 = scmp.ne.s32.totalorder %s79, %s80
    %p91 = scmp.eq.s32.totalorder %s20, 0
    %p92 = por %p90, %p91
    %p93 = scmp.ne.s32.totalorder %s79, %s80
    %p94 = scmp.eq.s32.totalorder %s21, 7
    %p95 = por %p93, %p94
    %p97 = scmp.ne.s32.totalorder %s80, %s96
    %p98 = scmp.eq.s32.totalorder %s21, 0
    %p99 = por %p97, %p98
    %s101 = sadd.s32 %s100, 1
    %p104 = scmp.eq.s32.totalorder %s15, 7
    %p105 = scmp.ne.s32.totalorder %s100, %s102
    %p106 = scmp.eq.s32.totalorder %s15, 0
    %p107 = por %p105, %p106
    %p108 = scmp.ne.s32.totalorder %s100, %s102
    %p109 = scmp.eq.s32.totalorder %s20, 7
    %p110 = por %p108, %p109
    %p111 = scmp.ne.s32.totalorder %s102, %s103
    %p112 = scmp.eq.s32.totalorder %s20, 0
    %p113 = por %p111, %p112
    %p114 = scmp.ne.s32.totalorder %s102, %s103
    %p115 = scmp.eq.s32.totalorder %s21, 7
    %p116 = por %p114, %p115
    %p118 = scmp.ne.s32.totalorder %s103, %s117
    %p119 = scmp.eq.s32.totalorder %s21, 0
    %p120 = por %p118, %p119
    %s122 = sadd.s32 %s121, 1
    %p125 = scmp.eq.s32.totalorder %s15, 7
    %p126 = scmp.ne.s32.totalorder %s121, %s123
    %p127 = scmp.eq.s32.totalorder %s15, 0
    %p128 = por %p126, %p127
    %p129 = scmp.ne.s32.totalorder %s121, %s123
    %p130 = scmp.eq.s32.totalorder %s20, 7
    %p131 = por %p129, %p130
    %p132 = scmp.ne.s32.totalorder %s123, %s124
    %p133 = scmp.eq.s32.totalorder %s20, 0
    %p134 = por %p132, %p133
    %p135 = scmp.ne.s32.totalorder %s123, %s124
    %p136 = scmp.eq.s32.totalorder %s21, 7
    %p137 = por %p135, %p136
    %p139 = scmp.ne.s32.totalorder %s124, %s138
    %p140 = scmp.eq.s32.totalorder %s21, 0
    %p141 = por %p139, %p140
    %s143 = sadd.s32 %s142, 1
    %p146 = scmp.eq.s32.totalorder %s15, 7
    %p147 = scmp.ne.s32.totalorder %s142, %s144
    %p148 = scmp.eq.s32.totalorder %s15, 0
    %p149 = por %p147, %p148
    %p150 = scmp.ne.s32.totalorder %s142, %s144
    %p151 = scmp.eq.s32.totalorder %s20, 7
    %p152 = por %p150, %p151
    %p153 = scmp.ne.s32.totalorder %s144, %s145
    %p154 = scmp.eq.s32.totalorder %s20, 0
    %p155 = por %p153, %p154
    %p156 = scmp.ne.s32.totalorder %s144, %s145
    %p157 = scmp.eq.s32.totalorder %s21, 7
    %p158 = por %p156, %p157
    %p160 = scmp.ne.s32.totalorder %s145, %s159
    %p161 = scmp.eq.s32.totalorder %s21, 0
    %p162 = por %p160, %p161
    %s164 = sadd.s32 %s163, 1
    %p167 = scmp.eq.s32.totalorder %s15, 7
    %p168 = scmp.ne.s32.totalorder %s163, %s165
    %p169 = scmp.eq.s32.totalorder %s15, 0
    %p170 = por %p168, %p169
    %p171 = scmp.ne.s32.totalorder %s163, %s165
    %p172 = scmp.eq.s32.totalorder %s20, 7
    %p173 = por %p171, %p172
    %p174 = scmp.ne.s32.totalorder %s165, %s166
    %p175 = scmp.eq.s32.totalorder %s20, 0
    %p176 = por %p174, %p175
    %p177 = scmp.ne.s32.totalorder %s165, %s166
    %p178 = scmp.eq.s32.totalorder %s21, 7
    %p179 = por %p177, %p178
    %p181 = scmp.ne.s32.totalorder %s166, %s180
    %p182 = scmp.eq.s32.totalorder %s21, 0
    %p183 = por %p181, %p182
    %s185 = sadd.s32 %s184, 1
    %p188 = scmp.eq.s32.totalorder %s15, 7
    %p189 = scmp.ne.s32.totalorder %s184, %s186
    %p190 = scmp.eq.s32.totalorder %s15, 0
    %p191 = por %p189, %p190
    %p192 = scmp.ne.s32.totalorder %s184, %s186
    %p193 = scmp.eq.s32.totalorder %s20, 7
    %p194 = por %p192, %p193
    %p195 = scmp.ne.s32.totalorder %s186, %s187
    %p196 = scmp.eq.s32.totalorder %s20, 0
    %p197 = por %p195, %p196
    %p198 = scmp.ne.s32.totalorder %s186, %s187
    %p199 = scmp.eq.s32.totalorder %s21, 7
    %p200 = por %p198, %p199
    %p202 = scmp.ne.s32.totalorder %s187, %s201
    %p203 = scmp.eq.s32.totalorder %s21, 0
    %p204 = por %p202, %p203
    %s206 = sadd.s32 %s205, 1
    %p209 = scmp.eq.s32.totalorder %s15, 7
    %p210 = scmp.ne.s32.totalorder %s205, %s207
    %p211 = scmp.eq.s32.totalorder %s15, 0
    %p212 = por %p210, %p211
    %p213 = scmp.ne.s32.totalorder %s205, %s207
    %p214 = scmp.eq.s32.totalorder %s20, 7
    %p215 = por %p213, %p214
    %p216 = scmp.ne.s32.totalorder %s207, %s208
    %p217 = scmp.eq.s32.totalorder %s20, 0
    %p218 = por %p216, %p217
    %p219 = scmp.ne.s32.totalorder %s207, %s208
    %p220 = scmp.eq.s32.totalorder %s21, 7
    %p221 = por %p219, %p220
    %p223 = scmp.ne.s32.totalorder %s208, %s222
    %p224 = scmp.eq.s32.totalorder %s21, 0
    %p225 = por %p223, %p224
    %s227 = sadd.s32 %s226, 1
    %p230 = scmp.eq.s32.totalorder %s15, 7
    %p231 = scmp.ne.s32.totalorder %s226, %s228
    %p232 = scmp.eq.s32.totalorder %s15, 0
    %p233 = por %p231, %p232
    %p234 = scmp.ne.s32.totalorder %s226, %s228
    %p235 = scmp.eq.s32.totalorder %s20, 7
    %p236 = por %p234, %p235
    %p237 = scmp.ne.s32.totalorder %s228, %s229
    %p238 = scmp.eq.s32.totalorder %s20, 0
    %p239 = por %p237, %p238
    %p240 = scmp.ne.s32.totalorder %s228, %s229
    %p241 = scmp.eq.s32.totalorder %s21, 7
    %p242 = por %p240, %p241
    %p244 = scmp.ne.s32.totalorder %s229, %s243
    %p245 = scmp.eq.s32.totalorder %s21, 0
    %p246 = por %p244, %p245
    %s247 = ssub.s32 %s22, %s41
    %s248 = ssub.s32 %s23, %s37
    %s249 = sor.u32 %s247, %s248
    %p250 = scmp.eq.s32.totalorder %s249, 0
    %s252 = sadd.s32 %s251, 1
    %s253 = scalar_select %p250, %s251, %s252
    %p256 = pneg %p250
    %p257 = scmp.eq.s32.totalorder %s15, 7
    %p258 = por %p256, %p257
    %p259 = scmp.ne.s32.totalorder %s251, %s254
    %p260 = scmp.eq.s32.totalorder %s15, 0
    %p261 = por %p259, %p260
    %p262 = scmp.ne.s32.totalorder %s251, %s254
    %p263 = scmp.eq.s32.totalorder %s20, 7
    %p264 = por %p262, %p263
    %p265 = scmp.ne.s32.totalorder %s254, %s255
    %p266 = scmp.eq.s32.totalorder %s20, 0
    %p267 = por %p265, %p266
    %p268 = scmp.ne.s32.totalorder %s254, %s255
    %p269 = scmp.eq.s32.totalorder %s21, 7
    %p270 = por %p268, %p269
    %p272 = scmp.ne.s32.totalorder %s255, %s271
    %p273 = scmp.eq.s32.totalorder %s21, 0
    %p274 = por %p272, %p273
    %p275 = scmp.le.s32.totalorder 1, %s15
    %p276 = scmp.lt.s32.totalorder %s15, 9
    %p277 = pnand %p275, %p276
    %p278 = pneg %p277
    // Predicated region
    $region9: #{tpu_custom_call.1} parent=5 // pred_check
      _
    $region10: #{tpu_custom_call.1} parent=5 // pred_check_branch
      %280 = sbr.rel (%p277) target = $region12
    $region11: #{tpu_custom_call.1} parent=5 // pred_region
      %s281 = ssub.s32 %s15, 1
      // Predicated region
      $region13: #{tpu_custom_call.1} parent=11 // pred_check
        %p282 = pneg %p113
      $region14: #{tpu_custom_call.1} parent=11 // pred_check_branch
        %284 = sbr.rel (%p282) target = $region16
      $region15: #{tpu_custom_call.1} parent=11 // pred_region
        _
      $region16: #{tpu_custom_call.1} parent=11 // pred_fallthru
        _
      // Predicated region
      $region17: #{tpu_custom_call.1} parent=11 // pred_check
        %p285 = pneg %p134
      $region18: #{tpu_custom_call.1} parent=11 // pred_check_branch
        %287 = sbr.rel (%p285) target = $region20
      $region19: #{tpu_custom_call.1} parent=11 // pred_region
        _
      $region20: #{tpu_custom_call.1} parent=11 // pred_fallthru
        _
      // Predicated region
      $region21: #{tpu_custom_call.1} parent=11 // pred_check
        %p288 = pneg %p155
      $region22: #{tpu_custom_call.1} parent=11 // pred_check_branch
        %290 = sbr.rel (%p288) target = $region24
      $region23: #{tpu_custom_call.1} parent=11 // pred_region
        _
      $region24: #{tpu_custom_call.1} parent=11 // pred_fallthru
        _
      // Predicated region
      $region25: #{tpu_custom_call.1} parent=11 // pred_check
        %p291 = pneg %p176
      $region26: #{tpu_custom_call.1} parent=11 // pred_check_branch
        %293 = sbr.rel (%p291) target = $region28
      $region27: #{tpu_custom_call.1} parent=11 // pred_region
        _
      $region28: #{tpu_custom_call.1} parent=11 // pred_fallthru
        _
      // Predicated region
      $region29: #{tpu_custom_call.1} parent=11 // pred_check
        %p294 = pneg %p197
      $region30: #{tpu_custom_call.1} parent=11 // pred_check_branch
        %296 = sbr.rel (%p294) target = $region32
      $region31: #{tpu_custom_call.1} parent=11 // pred_region
        _
      $region32: #{tpu_custom_call.1} parent=11 // pred_fallthru
        _
      // Predicated region
      $region33: #{tpu_custom_call.1} parent=11 // pred_check
        %p297 = pneg %p218
      $region34: #{tpu_custom_call.1} parent=11 // pred_check_branch
        %299 = sbr.rel (%p297) target = $region36
      $region35: #{tpu_custom_call.1} parent=11 // pred_region
        _
      $region36: #{tpu_custom_call.1} parent=11 // pred_fallthru
        _
      // Predicated region
      $region37: #{tpu_custom_call.1} parent=11 // pred_check
        %p300 = pneg %p239
      $region38: #{tpu_custom_call.1} parent=11 // pred_check_branch
        %302 = sbr.rel (%p300) target = $region40
      $region39: #{tpu_custom_call.1} parent=11 // pred_region
        _
      $region40: #{tpu_custom_call.1} parent=11 // pred_fallthru
        _
    $region12: #{tpu_custom_call.1} parent=5 // pred_fallthru
      _
    %p303 = scmp.lt.s32.totalorder %s15, 8
    // Predicated region
    $region41: #{tpu_custom_call.1} parent=5 // pred_check
      %p304 = pneg %p303
    $region42: #{tpu_custom_call.1} parent=5 // pred_check_branch
      %306 = sbr.rel (%p304) target = $region44
    $region43: #{tpu_custom_call.1} parent=5 // pred_region
      // Predicated region
      $region45: #{tpu_custom_call.1} parent=43 // pred_check
        %p307 = pneg %p58
      $region46: #{tpu_custom_call.1} parent=43 // pred_check_branch
        %309 = sbr.rel (%p307) target = $region48
      $region47: #{tpu_custom_call.1} parent=43 // pred_region
        %s310 = smul.u32 2, %s23
        %p311 = scmp.lt.s32.totalorder %s22, 1
        %s312 = scalar_select %p311, %s22, 1
        %p313 = scmp.lt.s32.totalorder %s24, 3
        %s314 = scalar_select %p313, %s24, 3
        %p315 = scmp.lt.s32.totalorder %s310, 1
        %s316 = scalar_select %p315, %s310, 1
        %s317 = smul.addr %s314, 2
        %s318 = sadd.s32 %s316, %s317
        %s319 = smul.addr %s312, 8
        %s320 = sadd.s32 %s318, %s319
        %s321 = smul.addr %s320, 4
        %s322 = scalar_lea.vmem %s0, %s321
        %s323 = smul.u32 2, %s23
      $region48: #{tpu_custom_call.1} parent=43 // pred_fallthru
        _
      // Predicated region
      $region49: #{tpu_custom_call.1} parent=43 // pred_check
        %p324 = pneg %p86
      $region50: #{tpu_custom_call.1} parent=43 // pred_check_branch
        %326 = sbr.rel (%p324) target = $region52
      $region51: #{tpu_custom_call.1} parent=43 // pred_region
        %s327 = smul.u32 2, %s23
        %p328 = scmp.lt.s32.totalorder %s22, 1
        %s329 = scalar_select %p328, %s22, 1
        %p330 = scmp.lt.s32.totalorder %s327, 1
        %s331 = scalar_select %p330, %s327, 1
        %s332 = smul.addr %s329, 2
        %s333 = sadd.s32 %s331, %s332
        %s334 = smul.addr %s333, 4
        %s335 = scalar_lea.vmem %s1, %s334
        %s336 = smul.u32 2, %s23
      $region52: #{tpu_custom_call.1} parent=43 // pred_fallthru
        _
    $region44: #{tpu_custom_call.1} parent=5 // pred_fallthru
      _
    %p337 = scmp.le.s32.totalorder 1, %s15
    %p338 = scmp.lt.s32.totalorder %s15, 9
    %p339 = pnand %p337, %p338
    %p340 = pneg %p339
    // Predicated region
    $region53: #{tpu_custom_call.1} parent=5 // pred_check
      _
    $region54: #{tpu_custom_call.1} parent=5 // pred_check_branch
      %342 = sbr.rel (%p339) target = $region56
    $region55: #{tpu_custom_call.1} parent=5 // pred_region
      %s343 = ssub.s32 %s15, 1
      %s344 = smul.u32 2, %s26
      %p345 = scmp.lt.s32.totalorder %s25, 1
      %s346 = scalar_select %p345, %s25, 1
      %p347 = scmp.lt.s32.totalorder %s27, 3
      %s348 = scalar_select %p347, %s27, 3
      %p349 = scmp.lt.s32.totalorder %s344, 1
      %s350 = scalar_select %p349, %s344, 1
      %s351 = smul.addr %s348, 2
      %s352 = sadd.s32 %s350, %s351
      %s353 = smul.addr %s346, 8
      %s354 = sadd.s32 %s352, %s353
      %s355 = smul.addr %s354, 4
      %s356 = scalar_lea.vmem %s0, %s355
      %p357 = pneg %p64
      %p358 = pneg %p61
      %s359 = smul.u32 2, %s26
      %p360 = scmp.lt.s32.totalorder %s25, 1
      %s361 = scalar_select %p360, %s25, 1
      %p362 = scmp.lt.s32.totalorder %s359, 1
      %s363 = scalar_select %p362, %s359, 1
      %s364 = smul.addr %s361, 2
      %s365 = sadd.s32 %s363, %s364
      %s366 = smul.addr %s365, 4
      %s367 = scalar_lea.vmem %s1, %s366
      %p368 = pneg %p92
      %p369 = pneg %p89
      %p370 = pneg %p113
      %p371 = pneg %p110
      %p372 = pneg %p134
      %p373 = pneg %p131
      %p374 = pneg %p155
      %p375 = pneg %p152
      %p376 = pneg %p176
      %p377 = pneg %p173
      %p378 = pneg %p197
      %p379 = pneg %p194
      %p380 = pneg %p218
      %p381 = pneg %p215
      %p382 = pneg %p239
      %p383 = pneg %p236
      %p384 = pneg %p267
      %p385 = pneg %p264
      %p386 = scmp.lt.s32.totalorder %s25, 1
      %s387 = scalar_select %p386, %s25, 1
      %p388 = scmp.lt.s32.totalorder %s26, 0
      %s389 = scalar_select %p388, %s26, 0
      %s390 = smul.addr %s387, 4
      %s391 = sadd.s32 %s389, %s390
      %s392 = smul.addr %s391, 8
      %s393 = scalar_lea.vmem %s9, %s392
      %s394 = smul.u32 2, %s26
      %p395 = scmp.lt.s32.totalorder %s25, 1
      %s396 = scalar_select %p395, %s25, 1
      %p397 = scmp.lt.s32.totalorder %s27, 3
      %s398 = scalar_select %p397, %s27, 3
      %p399 = scmp.lt.s32.totalorder %s394, 1
      %s400 = scalar_select %p399, %s394, 1
      %s401 = smul.addr %s398, 2
      %s402 = sadd.s32 %s400, %s401
      %s403 = smul.addr %s396, 8
      %s404 = sadd.s32 %s402, %s403
      %s405 = smul.addr %s404, 4
      %s406 = scalar_lea.vmem %s0, %s405
      %s407 = smul.u32 2, %s26
      %s408 = smul.u32 2, %s26
      %p409 = scmp.lt.s32.totalorder %s25, 1
      %s410 = scalar_select %p409, %s25, 1
      %p411 = scmp.lt.s32.totalorder %s408, 1
      %s412 = scalar_select %p411, %s408, 1
      %s413 = smul.addr %s410, 2
      %s414 = sadd.s32 %s412, %s413
      %s415 = smul.addr %s414, 4
      %s416 = scalar_lea.vmem %s1, %s415
      %s417 = smul.u32 2, %s26
      %p418 = scmp.lt.s32.totalorder %s25, 1
      %s419 = scalar_select %p418, %s25, 1
      %p420 = scmp.lt.s32.totalorder %s26, 0
      %s421 = scalar_select %p420, %s26, 0
      %s422 = smul.addr %s419, 4
      %s423 = sadd.s32 %s421, %s422
      %s424 = smul.addr %s423, 8
      %s425 = scalar_lea.vmem %s9, %s424
      %v427 = vld [vmem:[%s406] sm:$0xf]
      %v428 = vld [vmem:[%s406 + $0x4] sm:$0xf]
      %v429 = vld [vmem:[%s2] sm:$0xf]
      %v430 = vld [vmem:[%s2 + $0x4] sm:$0x1]
      %v431 = vld [vmem:[%s3] sm:$0x1]
      %v433 = vlaneseq
      %v434 = vshrl.u32 %v433, 7
      %v435 = vsub.s32 0, %v434
      %v436 = vrot.slane %v431, %v435
      %v440 = vunpack.c.l.b16 %v427
      %v441 = vunpack.c.l.b16 %v428
      %v442 = vpack.c.b16 %v441, %v440
      %v445 = vunpack.c.l.b16 %v429
      %v446 = vunpack.c.l.b16 %v430
      %v447 = vpack.c.b16 %v446, %v445
      %vm448 = vcmask 72704
      %v450 = vsel %vm448, %v442, 0
      %vm452 = vcmask 1043456
      %vm453 = vcmask 1044480
      %v454 = vsel %vm452, 4294967295, 65535
      %v455 = vsel %vm453, %v454, 0
      %v457 = vand.u32 %v447, %v455
      %459 = vmatprep.subr.bf16.mxu0 0
      %460 = vmatpush1.bf16.msra.mxu0 0
      %461 = vmatprep.subr.bf16.mxu0 0
      %462 = vmatpush1.bf16.msra.mxu0 0
      %463 = vmatprep.subr.bf16.mxu0 0
      %464 = vmatpush1.bf16.msra.mxu0 0
      %465 = vmatprep.subr.bf16.mxu0 0
      %466 = vmatpush1.bf16.msra.mxu0 0
      %467 = vmatprep.subr.bf16.mxu0 0
      %468 = vmatpush1.bf16.msra.mxu0 0
      %469 = vmatprep.subr.bf16.mxu0 0
      %470 = vmatpush1.bf16.msra.mxu0 0
      %471 = vmatprep.subr.bf16.mxu0 0
      %472 = vmatpush1.bf16.msra.mxu0 0
      %473 = vmatprep.subr.bf16.mxu0 0
      %474 = vmatpush1.bf16.msra.mxu0 %v457
      %475 = vmatprep.subr.bf16.mxu0 0
      %476 = vmatpush2.bf16.msra.mxu0 0
      %477 = vmatprep.subr.bf16.mxu0 0
      %478 = vmatpush2.bf16.msra.mxu0 0
      %479 = vmatprep.subr.bf16.mxu0 0
      %480 = vmatpush2.bf16.msra.mxu0 0
      %481 = vmatprep.subr.bf16.mxu0 0
      %482 = vmatpush2.bf16.msra.mxu0 0
      %483 = vmatprep.subr.bf16.mxu0 0
      %484 = vmatpush2.bf16.msra.mxu0 0
      %485 = vmatprep.subr.bf16.mxu0 0
      %486 = vmatpush2.bf16.msra.mxu0 0
      %487 = vmatprep.subr.bf16.mxu0 0
      %488 = vmatpush2.bf16.msra.mxu0 0
      %489 = vmatprep.subr.bf16.mxu0 0
      %490 = vmatpush2.bf16.msra.mxu0 0
      %491 = vmatprep.mubr.bf16.mxu0 0
      %492 = vmatmul.mubr.bf16.gmra.mxu0 %v450
      %v493 = vpop.f32.mrf.mxu0
      %v494 = vadd.f32 %v436, %v493
      %v495 = vpop.f32.mrf.mxu0
      %v496 = vpop.f32.mrf.mxu0
      %v497 = vadd.f32 %v436, %v496
      %v498 = vpop.f32.mrf.mxu0
      %499 = vdwg.mxu0
      %v500 = vmax.f32 %v494, 0.0
      %v501 = vmax.f32 %v497, 0.0
      %v502 = vld [vmem:[%s4] sm:$0xf]
      %v503 = vld [vmem:[%s4 + $0x4] sm:$0xf]
      %v504 = vpack.c.bf16 %v501, %v500
      %v505 = vld [vmem:[%s5] sm:$0x1]
      %v507 = vlaneseq
      %v508 = vshrl.u32 %v507, 7
      %v509 = vsub.s32 0, %v508
      %v510 = vrot.slane %v505, %v509
      %v514 = vunpack.c.l.b16 %v502
      %v515 = vunpack.c.l.b16 %v503
      %v516 = vpack.c.b16 %v515, %v514
      %vm518 = vcmask 130048
      %v520 = vsel %vm518, %v504, 0
      %522 = vmatprep.subr.bf16.mxu0 0
      %523 = vmatpush1.bf16.msra.mxu0 0
      %524 = vmatprep.subr.bf16.mxu0 0
      %525 = vmatpush1.bf16.msra.mxu0 0
      %526 = vmatprep.subr.bf16.mxu0 0
      %527 = vmatpush1.bf16.msra.mxu0 0
      %528 = vmatprep.subr.bf16.mxu0 0
      %529 = vmatpush1.bf16.msra.mxu0 0
      %530 = vmatprep.subr.bf16.mxu0 0
      %531 = vmatpush1.bf16.msra.mxu0 0
      %532 = vmatprep.subr.bf16.mxu0 0
      %533 = vmatpush1.bf16.msra.mxu0 0
      %534 = vmatprep.subr.bf16.mxu0 0
      %535 = vmatpush1.bf16.msra.mxu0 0
      %536 = vmatprep.subr.bf16.mxu0 0
      %537 = vmatpush1.bf16.msra.mxu0 %v516
      %538 = vmatprep.subr.bf16.mxu0 0
      %539 = vmatpush2.bf16.msra.mxu0 0
      %540 = vmatprep.subr.bf16.mxu0 0
      %541 = vmatpush2.bf16.msra.mxu0 0
      %542 = vmatprep.subr.bf16.mxu0 0
      %543 = vmatpush2.bf16.msra.mxu0 0
      %544 = vmatprep.subr.bf16.mxu0 0
      %545 = vmatpush2.bf16.msra.mxu0 0
      %546 = vmatprep.subr.bf16.mxu0 0
      %547 = vmatpush2.bf16.msra.mxu0 0
      %548 = vmatprep.subr.bf16.mxu0 0
      %549 = vmatpush2.bf16.msra.mxu0 0
      %550 = vmatprep.subr.bf16.mxu0 0
      %551 = vmatpush2.bf16.msra.mxu0 0
      %552 = vmatprep.subr.bf16.mxu0 0
      %553 = vmatpush2.bf16.msra.mxu0 0
      %554 = vmatprep.mubr.bf16.mxu0 0
      %555 = vmatmul.mubr.bf16.gmra.mxu0 %v520
      %v556 = vpop.f32.mrf.mxu0
      %v557 = vadd.f32 %v510, %v556
      %v558 = vpop.f32.mrf.mxu0
      %v559 = vpop.f32.mrf.mxu0
      %v560 = vadd.f32 %v510, %v559
      %v561 = vpop.f32.mrf.mxu0
      %562 = vdwg.mxu0
      %v563 = vmax.f32 %v557, 0.0
      %v564 = vmax.f32 %v560, 0.0
      %p565 = scmp.eq.s32.totalorder %s27, 0
      // Predicated region
      $region57: #{tpu_custom_call.1} parent=55 // pred_check
        %p566 = pneg %p565
      $region58: #{tpu_custom_call.1} parent=55 // pred_check_branch
        %568 = sbr.rel (%p566) target = $region60
      $region59: #{tpu_custom_call.1} parent=55 // pred_region
        %vm569 = vcmask 261120
        %570 = vst.msk [vmem:[#allocation2] sm:$0xff] %vm569, -inf
        %571 = vst.msk [vmem:[#allocation2 + $0x8] sm:$0xff] %vm569, -inf
      $region60: #{tpu_custom_call.1} parent=55 // pred_fallthru
        _
      %v572 = vld [vmem:[#allocation2] sm:$0xff]
      %v573 = vld [vmem:[#allocation2 + $0x8] sm:$0xff]
      %v574 = vmax.f32 %v572, %v563
      %v575 = vmax.f32 %v573, %v564
      %vm576 = vcmask 261120
      %577 = vst.msk [vmem:[#allocation2] sm:$0xff] %vm576, %v574
      %578 = vst.msk [vmem:[#allocation2 + $0x8] sm:$0xff] %vm576, %v575
      %p579 = scmp.eq.s32.totalorder %s27, 3
      // Predicated region
      $region61: #{tpu_custom_call.1} parent=55 // pred_check
        %p580 = pneg %p579
      $region62: #{tpu_custom_call.1} parent=55 // pred_check_branch
        %582 = sbr.rel (%p580) target = $region64
      $region63: #{tpu_custom_call.1} parent=55 // pred_region
        %v583 = vld [vmem:[#allocation2] sm:$0xff]
        %v584 = vld [vmem:[#allocation2 + $0x8] sm:$0xff]
        %v585 = vld [vmem:[%s6] sm:$0xf]
        %v586 = vld [vmem:[%s6 + $0x4] sm:$0xf]
        %v587 = vld [vmem:[%s6 + $0x8] sm:$0xf]
        %v588 = vld [vmem:[%s6 + $0xc] sm:$0xf]
        %v589 = vld [vmem:[%s7] sm:$0xf]
        %v590 = vld [vmem:[%s7 + $0x4] sm:$0xf]
        %v591 = vld [vmem:[%s7 + $0x8] sm:$0xf]
        %v592 = vld [vmem:[%s7 + $0xc] sm:$0xf]
        %v593 = vld [vmem:[%s8] sm:$0xff]
        %v594 = vld [vmem:[%s8 + $0x8] sm:$0xff]
        %v595 = vld [vmem:[%s8 + $0x10] sm:$0xff]
        %v596 = vld [vmem:[%s8 + $0x18] sm:$0xff]
        %v597 = vpack.c.bf16 %v584, %v583
        %v598 = vld [vmem:[%s416] sm:$0xf]
        %v599 = vld [vmem:[%s416 + $0x4] sm:$0xf]
        %v604 = vunpack.c.l.b16 %v589
        %v605 = vunpack.c.l.b16 %v590
        %v606 = vunpack.c.l.b16 %v591
        %v607 = vunpack.c.l.b16 %v592
        %v608 = vpack.c.b16 %v605, %v604
        %v609 = vpack.c.b16 %v607, %v606
        %v612 = vunpack.c.l.b16 %v598
        %v613 = vunpack.c.l.b16 %v599
        %v614 = vpack.c.b16 %v613, %v612
        %vm615 = vcmask 31744
        %v617 = vsel %vm615, %v608, 0
        %v620 = vsel %vm615, %v609, 0
        %v623 = vsel %vm615, %v614, 0
        %625 = vmatprep.subr.bf16.mxu0 0
        %626 = vmatpush1.bf16.xpose.msra.mxu0 0
        %627 = vmatprep.subr.bf16.mxu0 0
        %628 = vmatpush1.bf16.xpose.msra.mxu0 0
        %629 = vmatprep.subr.bf16.mxu0 0
        %630 = vmatpush1.bf16.xpose.msra.mxu0 0
        %631 = vmatprep.subr.bf16.mxu0 0
        %632 = vmatpush1.bf16.xpose.msra.mxu0 0
        %633 = vmatprep.subr.bf16.mxu0 0
        %634 = vmatpush1.bf16.xpose.msra.mxu0 0
        %635 = vmatprep.subr.bf16.mxu0 0
        %636 = vmatpush1.bf16.xpose.msra.mxu0 0
        %637 = vmatprep.subr.bf16.mxu0 0
        %638 = vmatpush1.bf16.xpose.msra.mxu0 0
        %639 = vmatprep.subr.bf16.mxu0 0
        %640 = vmatpush1.bf16.xpose.msra.mxu0 %v623
        %641 = vmatprep.subr.bf16.mxu0 0
        %642 = vmatpush2.bf16.xpose.msra.mxu0 0
        %643 = vmatprep.subr.bf16.mxu0 0
        %644 = vmatpush2.bf16.xpose.msra.mxu0 0
        %645 = vmatprep.subr.bf16.mxu0 0
        %646 = vmatpush2.bf16.xpose.msra.mxu0 0
        %647 = vmatprep.subr.bf16.mxu0 0
        %648 = vmatpush2.bf16.xpose.msra.mxu0 0
        %649 = vmatprep.subr.bf16.mxu0 0
        %650 = vmatpush2.bf16.xpose.msra.mxu0 0
        %651 = vmatprep.subr.bf16.mxu0 0
        %652 = vmatpush2.bf16.xpose.msra.mxu0 0
        %653 = vmatprep.subr.bf16.mxu0 0
        %654 = vmatpush2.bf16.xpose.msra.mxu0 0
        %655 = vmatprep.subr.bf16.mxu0 0
        %656 = vmatpush2.bf16.xpose.msra.mxu0 0
        %657 = vmatprep.mubr.bf16.mxu0 0
        %658 = vmatmul.mubr.bf16.gmra.mxu0 %v617
        %v659 = vpop.f32.mrf.mxu0
        %v660 = vadd.f32 0.0, %v659
        %v661 = vpop.f32.mrf.mxu0
        %v662 = vpop.f32.mrf.mxu0
        %v663 = vadd.f32 0.0, %v662
        %v664 = vpop.f32.mrf.mxu0
        %665 = vmatprep.mubr.bf16.mxu0 0
        %666 = vmatmul.mubr.bf16.gmra.mxu0 %v620
        %v667 = vpop.f32.mrf.mxu0
        %v668 = vadd.f32 0.0, %v667
        %v669 = vpop.f32.mrf.mxu0
        %v670 = vpop.f32.mrf.mxu0
        %v671 = vadd.f32 0.0, %v670
        %v672 = vpop.f32.mrf.mxu0
        %673 = vdwg.mxu0
        %v678 = vunpack.c.l.b16 %v585
        %v679 = vunpack.c.l.b16 %v586
        %v680 = vunpack.c.l.b16 %v587
        %v681 = vunpack.c.l.b16 %v588
        %v682 = vpack.c.b16 %v679, %v678
        %v683 = vpack.c.b16 %v681, %v680
        %v685 = vsel %vm576, %v682, 0
        %v688 = vsel %vm576, %v683, 0
        %v691 = vsel %vm576, %v597, 0
        %693 = vmatprep.subr.bf16.mxu0 0
        %694 = vmatpush1.bf16.xpose.msra.mxu0 0
        %695 = vmatprep.subr.bf16.mxu0 0
        %696 = vmatpush1.bf16.xpose.msra.mxu0 0
        %697 = vmatprep.subr.bf16.mxu0 0
        %698 = vmatpush1.bf16.xpose.msra.mxu0 0
        %699 = vmatprep.subr.bf16.mxu0 0
        %700 = vmatpush1.bf16.xpose.msra.mxu0 0
        %701 = vmatprep.subr.bf16.mxu0 0
        %702 = vmatpush1.bf16.xpose.msra.mxu0 0
        %703 = vmatprep.subr.bf16.mxu0 0
        %704 = vmatpush1.bf16.xpose.msra.mxu0 0
        %705 = vmatprep.subr.bf16.mxu0 0
        %706 = vmatpush1.bf16.xpose.msra.mxu0 0
        %707 = vmatprep.subr.bf16.mxu0 0
        %708 = vmatpush1.bf16.xpose.msra.mxu0 %v691
        %709 = vmatprep.subr.bf16.mxu0 0
        %710 = vmatpush2.bf16.xpose.msra.mxu0 0
        %711 = vmatprep.subr.bf16.mxu0 0
        %712 = vmatpush2.bf16.xpose.msra.mxu0 0
        %713 = vmatprep.subr.bf16.mxu0 0
        %714 = vmatpush2.bf16.xpose.msra.mxu0 0
        %715 = vmatprep.subr.bf16.mxu0 0
        %716 = vmatpush2.bf16.xpose.msra.mxu0 0
        %717 = vmatprep.subr.bf16.mxu0 0
        %718 = vmatpush2.bf16.xpose.msra.mxu0 0
        %719 = vmatprep.subr.bf16.mxu0 0
        %720 = vmatpush2.bf16.xpose.msra.mxu0 0
        %721 = vmatprep.subr.bf16.mxu0 0
        %722 = vmatpush2.bf16.xpose.msra.mxu0 0
        %723 = vmatprep.subr.bf16.mxu0 0
        %724 = vmatpush2.bf16.xpose.msra.mxu0 0
        %725 = vmatprep.mubr.bf16.mxu0 0
        %726 = vmatmul.mubr.bf16.gmra.mxu0 %v685
        %v727 = vpop.f32.mrf.mxu0
        %v728 = vadd.f32 %v660, %v727
        %v729 = vpop.f32.mrf.mxu0
        %v730 = vpop.f32.mrf.mxu0
        %v731 = vadd.f32 %v663, %v730
        %v732 = vpop.f32.mrf.mxu0
        %733 = vmatprep.mubr.bf16.mxu0 0
        %734 = vmatmul.mubr.bf16.gmra.mxu0 %v688
        %v735 = vpop.f32.mrf.mxu0
        %v736 = vadd.f32 %v668, %v735
        %v737 = vpop.f32.mrf.mxu0
        %v738 = vpop.f32.mrf.mxu0
        %v739 = vadd.f32 %v671, %v738
        %v740 = vpop.f32.mrf.mxu0
        %741 = vdwg.mxu0
        %743 = vset.pattern.permute.xlu0 0
        %744 = vperm.xlu0 %743, %v593
        %v745 = vpop.permute.xlu0 %744
        %748 = vset.pattern.permute.xlu0 0
        %749 = vperm.xlu0 %748, %v594
        %v750 = vpop.permute.xlu0 %749
        %753 = vset.pattern.permute.xlu0 0
        %754 = vperm.xlu0 %753, %v595
        %v755 = vpop.permute.xlu0 %754
        %758 = vset.pattern.permute.xlu0 0
        %759 = vperm.xlu0 %758, %v596
        %v760 = vpop.permute.xlu0 %759
        %v762 = vadd.f32 %v728, %v745
        %v763 = vadd.f32 %v731, %v750
        %v764 = vadd.f32 %v736, %v755
        %v765 = vadd.f32 %v739, %v760
        %v766 = vmax.f32 %v762, 0.0
        %v767 = vmax.f32 %v763, 0.0
        %v768 = vmax.f32 %v764, 0.0
        %v769 = vmax.f32 %v765, 0.0
        %770 = vst.msk [vmem:[%s425] sm:$0xff] %vm518, %v766
        %771 = vst.msk [vmem:[%s425 + $0x8] sm:$0xff] %vm518, %v767
        %772 = vst.msk [vmem:[%s425 + $0x10] sm:$0xff] %vm518, %v768
        %773 = vst.msk [vmem:[%s425 + $0x18] sm:$0xff] %vm518, %v769
      $region64: #{tpu_custom_call.1} parent=55 // pred_fallthru
        _
      %p774 = scmp.lt.s32.totalorder %s25, 1
      %s775 = scalar_select %p774, %s25, 1
      %p776 = scmp.lt.s32.totalorder %s26, 0
      %s777 = scalar_select %p776, %s26, 0
      %s778 = smul.addr %s775, 4
      %s779 = sadd.s32 %s777, %s778
      %s780 = smul.addr %s779, 8
      %s781 = scalar_lea.vmem %s9, %s780
      // Predicated region
      $region65: #{tpu_custom_call.1} parent=55 // pred_check
        %p782 = pneg %p264
      $region66: #{tpu_custom_call.1} parent=55 // pred_check_branch
        %784 = sbr.rel (%p782) target = $region68
      $region67: #{tpu_custom_call.1} parent=55 // pred_region
        _
      $region68: #{tpu_custom_call.1} parent=55 // pred_fallthru
        _
    $region56: #{tpu_custom_call.1} parent=5 // pred_fallthru
      _
    %p785 = scmp.le.s32.totalorder 2, %s15
    // Predicated region
    $region69: #{tpu_custom_call.1} parent=5 // pred_check
      %p786 = pneg %p785
    $region70: #{tpu_custom_call.1} parent=5 // pred_check_branch
      %788 = sbr.rel (%p786) target = $region72
    $region71: #{tpu_custom_call.1} parent=5 // pred_region
      %s789 = ssub.s32 %s15, 2
      // Predicated region
      $region73: #{tpu_custom_call.1} parent=71 // pred_check
        %p790 = pneg %p270
      $region74: #{tpu_custom_call.1} parent=71 // pred_check_branch
        %792 = sbr.rel (%p790) target = $region76
      $region75: #{tpu_custom_call.1} parent=71 // pred_region
        %p793 = scmp.lt.s32.totalorder %s28, 1
        %s794 = scalar_select %p793, %s28, 1
        %p795 = scmp.lt.s32.totalorder %s29, 0
        %s796 = scalar_select %p795, %s29, 0
        %s797 = smul.addr %s794, 4
        %s798 = sadd.s32 %s796, %s797
        %s799 = smul.addr %s798, 8
        %s800 = scalar_lea.vmem %s9, %s799
      $region76: #{tpu_custom_call.1} parent=71 // pred_fallthru
        _
    $region72: #{tpu_custom_call.1} parent=5 // pred_fallthru
      _
  $region6: #{tpu_custom_call.1} parent=0 // loop_footer
    %s19 = sadd.s32 1, %s15
  $region7: #{tpu_custom_call.1} parent=0 // loop_footer_branch
    %14 = sbr.rel target = $region3
  $region8: #{tpu_custom_call.1} parent=0 // loop_exit
    _

</llo_original>
